<compile_context>
chip_gen: v5e
topology: v5e:2x2
jax: 0.10.0
libtpu: 0.0.40
codegen_flags: <defaults>
</compile_context>

<pallas_src>
import functools

import jax
import jax.numpy as jnp
import numpy as np
from jax.experimental import pallas as pl
from jax.experimental.pallas import tpu as pltpu

EPSILON = 1e-09

# Tile caps (clamped / adapted to the padded problem size).
_TM = 512    # batch tile   (sublane axis, multiple of 8)
_TN = 256    # unit tile    (lane axis, multiple of 128 -> dense stores)
_TK = 1024   # input tile   (contraction, multiple of 128)

_VMEM_LIMIT = 32 * 1024 * 1024   # safe on v5e/v6e (128 MiB) and v7x (64 MiB)


def _round_up(x: int, m: int) -> int:
    return ((x + m - 1) // m) * m


def _choose_tile(dim: int, unit: int, cap: int, tiles_first: bool):
    """Pick (tile, padded) with tile % unit == 0, tile <= cap, tile | padded.

    If the unit-padded dim fits under the cap it becomes a single tile with
    minimal padding.  Otherwise scan candidate tiles; `tiles_first=True`
    (batch axis, unit=8) minimizes grid steps first, otherwise (lane axes,
    unit=128) minimizes padded size first.
    """
    base = _round_up(dim, unit)
    cap = max(unit, (cap // unit) * unit)
    if base <= cap:
        return base, base
    best = None
    t = cap
    while t >= unit:
        padded = _round_up(dim, t)
        ntiles = padded // t
        key = (ntiles, padded, -t) if tiles_first else (padded, ntiles, -t)
        if best is None or key < best[0]:
            best = (key, t, padded)
        t -= unit
    return best[1], best[2]


# --------------------------------------------------------------------------
# Kernels
# --------------------------------------------------------------------------
def _hidden_kernel(scal_ref,                       # SMEM (2,): [t_min, t_max]
                   tj_ref, w_ref, bias_ref,        # VMEM tiles
                   out_ref, min_ref,               # outputs
                   colsum_ref,                     # VMEM scratch (1, tn)
                   *, block_m, valid_rows):
    i = pl.program_id(0)
    k = pl.program_id(2)
    nk = pl.num_programs(2)

    # Output tile doubles as the f32 accumulator (resident across k).
    @pl.when(k == 0)
    def _():
        out_ref[...] = jnp.zeros_like(out_ref)
        colsum_ref[...] = jnp.zeros_like(colsum_ref)

    out_ref[...] += jnp.dot(tj_ref[...], w_ref[...],
                            preferred_element_type=jnp.float32)
    # colsum(W) rides the XLU slot (essentially free under the MXU).
    colsum_ref[...] += jnp.sum(w_ref[...], axis=0, keepdims=True,
                               dtype=jnp.float32)

    # Epilogue once per (i, j) tile: bias + clamp + per-tile masked min.
    @pl.when(k == nk - 1)
    def _():
        t_min = scal_ref[0]
        t_max = scal_ref[1]
        # ti = (tj - t_min) @ W + (t_max - t_min - D) + t_min
        #    = tj @ W - t_min * colsum(W) + (t_max - D)
        ti = out_ref[...] + (bias_ref[...] - t_min * colsum_ref[...])
        ti = jnp.where(ti < t_max, ti, t_max)
        out_ref[...] = ti

        valid = jnp.isfinite(ti) & (ti < t_max)
        if valid_rows is not None:   # trace-time: only when batch is padded
            row_ids = (jax.lax.broadcasted_iota(jnp.int32, ti.shape, 0)
                       + i * block_m)
            valid = valid & (row_ids < valid_rows)
        tile_min = jnp.min(jnp.where(valid, ti, jnp.inf))
        # Per-(i,j)-tile partial min; reduced in the wrapper.  No cross-tile
        # state -> safe under v7x 2-TC "parallel" sharding.
        min_ref[...] = jnp.broadcast_to(tile_min, min_ref.shape)


def _output_kernel(scal_ref,                       # SMEM (1,): [t_min]
                   tj_ref, w_ref, bias_ref, out_ref, colsum_ref):
    k = pl.program_id(2)

    @pl.when(k == 0)
    def _():
        out_ref[...] = jnp.zeros_like(out_ref)
        colsum_ref[...] = jnp.zeros_like(colsum_ref)

    out_ref[...] += jnp.dot(tj_ref[...], w_ref[...],
                            preferred_element_type=jnp.float32)
    colsum_ref[...] += jnp.sum(w_ref[...], axis=0, keepdims=True,
                               dtype=jnp.float32)

    @pl.when(k == pl.num_programs(2) - 1)
    def _():
        # out = alpha*time_diff + (t_min - tj)@W
        #     = bias + t_min*colsum(W) - tj@W
        t_min = scal_ref[0]
        out_ref[...] = (bias_ref[...] + t_min * colsum_ref[...]) - out_ref[...]


# --------------------------------------------------------------------------
# Wrapper
# --------------------------------------------------------------------------
@functools.partial(jax.jit, static_argnames=("output_layer", "use_bf16"))
def spiking_dense_forward(tj, kernel, d_i, t_min_prev, t_min, t_max,
                          output_layer=False, use_bf16=False):
    """Pallas forward for SpikingDense.

    tj:     (B, Din) float32  input spike times
    kernel: (Din, U) float32  weights
    d_i:    (U,)     float32  threshold adjustment
    t_min_prev, t_min, t_max: scalars
    use_bf16: cast tj/W to bfloat16 for the MXU (relaxed-tolerance mode).
    Returns (output, min_ti); min_ti is None for the output layer.
    """
    tj = tj.astype(jnp.float32)
    kernel = kernel.astype(jnp.float32)
    d_i = d_i.astype(jnp.float32)
    t_min_prev = jnp.asarray(t_min_prev, jnp.float32)
    t_min = jnp.asarray(t_min, jnp.float32)
    t_max = jnp.asarray(t_max, jnp.float32)

    batch, input_dim = tj.shape
    units = kernel.shape[1]

    # ---- tile sizes & minimal zero padding (MXU / lane aligned) -----------
    tm, m_pad = _choose_tile(batch, 8, _TM, tiles_first=True)
    tn, n_pad = _choose_tile(units, 128, _TN, tiles_first=False)
    tk, k_pad = _choose_tile(input_dim, 128, _TK, tiles_first=False)

    if (m_pad, k_pad) != (batch, input_dim):
        tj_p = jnp.pad(tj, ((0, m_pad - batch), (0, k_pad - input_dim)))
    else:
        tj_p = tj
    if (k_pad, n_pad) != (input_dim, units):
        w_p = jnp.pad(kernel, ((0, k_pad - input_dim), (0, n_pad - units)))
    else:
        w_p = kernel
    d_p = d_i if n_pad == units else jnp.pad(d_i, (0, n_pad - units))
    d_p = d_p.reshape(1, n_pad)

    mm_dtype = jnp.bfloat16 if use_bf16 else jnp.float32
    tj_in = tj_p.astype(mm_dtype)
    w_in = w_p.astype(mm_dtype)

    grid = (m_pad // tm, n_pad // tn, k_pad // tk)
    nm, nn = grid[0], grid[1]
    tj_spec = pl.BlockSpec((tm, tk), lambda i, j, k: (i, k))
    w_spec = pl.BlockSpec((tk, tn), lambda i, j, k: (k, j))
    bias_spec = pl.BlockSpec((1, tn), lambda i, j, k: (0, j))
    out_spec = pl.BlockSpec((tm, tn), lambda i, j, k: (i, j))
    smem_in = pl.BlockSpec(memory_space=pltpu.MemorySpace.SMEM)

    if output_layer:
        time_diff = t_min - t_min_prev
        safe_time_diff = jnp.where(time_diff == 0.0,
                                   jnp.float32(EPSILON), time_diff)
        bias = d_p * (time_diff / safe_time_diff)        # (1, n_pad)
        scal = t_min.reshape(1)

        out_p = pl.pallas_call(
            _output_kernel,
            out_shape=jax.ShapeDtypeStruct((m_pad, n_pad), jnp.float32),
            grid=grid,
            in_specs=[smem_in, tj_spec, w_spec, bias_spec],
            out_specs=out_spec,
            scratch_shapes=[pltpu.VMEM((1, tn), jnp.float32)],
            compiler_params=pltpu.CompilerParams(
                dimension_semantics=("parallel", "parallel", "arbitrary"),
                vmem_limit_bytes=_VMEM_LIMIT),
        )(scal, tj_in, w_in, bias)
        return out_p[:batch, :units], None

    # ---- hidden layer ------------------------------------------------------
    # Padded unit columns (zero W cols, zero D_i) give acc == 0, colsum == 0
    # and bias == t_max, i.e. ti == t_max exactly -> excluded from the min.
    bias = t_max - d_p                                    # (1, n_pad)
    scal = jnp.stack([t_min, t_max])                      # (2,)
    has_row_pad = m_pad != batch
    kern = functools.partial(_hidden_kernel, block_m=tm,
                             valid_rows=(batch if has_row_pad else None))
    min_spec = pl.BlockSpec((8, 128), lambda i, j, k: (i, j))

    out_p, min_parts = pl.pallas_call(
        kern,
        out_shape=(jax.ShapeDtypeStruct((m_pad, n_pad), jnp.float32),
                   jax.ShapeDtypeStruct((nm * 8, nn * 128), jnp.float32)),
        grid=grid,
        in_specs=[smem_in, tj_spec, w_spec, bias_spec],
        out_specs=(out_spec, min_spec),
        scratch_shapes=[pltpu.VMEM((1, tn), jnp.float32)],
        compiler_params=pltpu.CompilerParams(
            dimension_semantics=("parallel", "parallel", "arbitrary"),
            vmem_limit_bytes=_VMEM_LIMIT),
    )(scal, tj_in, w_in, bias)

    mn = jnp.min(min_parts)
    min_ti = jnp.where(jnp.isinf(mn), t_max, mn).reshape(1)
    return out_p[:batch, :units], min_ti


# --------------------------------------------------------------------------
# Pure-JAX reference (mirrors the PyTorch module exactly)
# --------------------------------------------------------------------------
def _reference(tj, kernel, d_i, t_min_prev, t_min, t_max, output_layer):
    tj = tj.astype(jnp.float32)
    if output_layer:
        w_mult_x = (t_min - tj) @ kernel
        time_diff = t_min - t_min_prev
        safe = EPSILON if time_diff == 0 else time_diff
        alpha = d_i / safe
        return alpha * time_diff + w_mult_x, None
    threshold = t_max - t_min - d_i
    ti = (tj - t_min) @ kernel + threshold + t_min
    ti = jnp.where(ti < t_max, ti, t_max)
    mask = jnp.isfinite(ti) & (ti < t_max)
    masked = jnp.where(mask, ti, jnp.inf)
    mn = jnp.min(masked)
    min_ti = jnp.where(jnp.isinf(mn), jnp.float32(t_max), mn).reshape(1)
    return ti, min_ti


def _run_case(key, batch, input_dim, units, rtol, atol, use_bf16=False):
    k_w, k_d, k_tj = jax.random.split(key, 3)
    limit = float(np.sqrt(6.0 / (input_dim + units)))          # glorot_uniform
    W = jax.random.uniform(k_w, (input_dim, units), jnp.float32, -limit, limit)
    D_i = jax.random.uniform(k_d, (units,), jnp.float32, 0.0, 0.2)
    tj = jax.random.uniform(k_tj, (batch, input_dim), jnp.float32, 0.0, 1.0)
    t_min_prev, t_min, t_max = 0.0, 1.0, 2.0

    # Hidden layer
    out_h, min_h = spiking_dense_forward(tj, W, D_i, t_min_prev, t_min, t_max,
                                         output_layer=False, use_bf16=use_bf16)
    jax.block_until_ready((out_h, min_h))
    ref_h, ref_min = _reference(tj, W, D_i, t_min_prev, t_min, t_max, False)
    np.testing.assert_allclose(np.asarray(out_h), np.asarray(ref_h),
                               rtol=rtol, atol=atol)
    np.testing.assert_allclose(np.asarray(min_h), np.asarray(ref_min),
                               rtol=rtol, atol=atol)

    # Output layer
    out_o, min_o = spiking_dense_forward(tj, W, D_i, t_min_prev, t_min, t_max,
                                         output_layer=True, use_bf16=use_bf16)
    jax.block_until_ready(out_o)
    ref_o, _ = _reference(tj, W, D_i, t_min_prev, t_min, t_max, True)
    np.testing.assert_allclose(np.asarray(out_o), np.asarray(ref_o),
                               rtol=rtol, atol=atol)
    assert min_o is None


# --------------------------------------------------------------------------
# Main
# --------------------------------------------------------------------------
if __name__ == "__main__":
    key = jax.random.PRNGKey(0)
    k1, k2, k3 = jax.random.split(key, 3)

    # Case 1: small, unaligned shapes -> lane/row padding + row mask.
    _run_case(k1, batch=6, input_dim=40, units=48, rtol=1e-5, atol=1e-5)

    # Case 2: multi-tile grid (2 x 3 x 3) -> K accumulation, in-kernel
    # colsum, per-tile min reduction across M and N tiles, row padding.
    _run_case(k2, batch=530, input_dim=1100, units=384, rtol=1e-4, atol=1e-4)

    # Case 3: bf16 MXU input path (relaxed tolerance), aligned shapes.
    _run_case(k3, batch=64, input_dim=256, units=256, rtol=1e-1, atol=1e-1,
              use_bf16=True)

    # TODO(synk): robustness_params (noise / quantization) is an unimplemented
    # placeholder in the reference module; not translated.
    print("KERNEL_OK")
</pallas_src>

<mosaic_0001>
module attributes {stable_mosaic.version = 11 : i64} {
  func.func @_hidden_kernel(%arg0: i32, %arg1: i32, %arg2: i32, %arg3: memref<2xf32, #tpu.memory_space<smem>>, %arg4: memref<8x128xf32, #tpu.memory_space<vmem>>, %arg5: memref<128x128xf32, #tpu.memory_space<vmem>>, %arg6: memref<1x128xf32, #tpu.memory_space<vmem>>, %arg7: memref<8x128xf32, #tpu.memory_space<vmem>>, %arg8: memref<8x128xf32, #tpu.memory_space<vmem>>, %arg9: memref<1x128xf32, #tpu.memory_space<vmem>>) attributes {dimension_semantics = [#tpu.dimension_semantics<parallel>, #tpu.dimension_semantics<parallel>, #tpu.dimension_semantics<arbitrary>], iteration_bounds = array<i64: 1, 1, 1>, scalar_prefetch = 0 : i64, scratch_operands = 1 : i64, tpu.core_type = #tpu.core_type<tc>, window_params = [{transform_indices = @transform_0, window_bounds = array<i64: 2>}, {transform_indices = @transform_1, window_bounds = array<i64: 8, 128>}, {transform_indices = @transform_2, window_bounds = array<i64: 128, 128>}, {transform_indices = @transform_3, window_bounds = array<i64: 1, 128>}, {transform_indices = @transform_4, window_bounds = array<i64: 8, 128>}, {transform_indices = @transform_5, window_bounds = array<i64: 8, 128>}]} {
    %c0_i32 = arith.constant 0 : i32
    %0 = arith.cmpi eq, %arg2, %c0_i32 : i32
    %1 = arith.extui %0 : i1 to i32
    %c0_i32_0 = arith.constant 0 : i32
    %2 = arith.cmpi ne, %1, %c0_i32_0 : i32
    scf.if %2 {
      %cst_17 = arith.constant 0.000000e+00 : f32
      %18 = vector.broadcast %cst_17 : f32 to vector<8x128xf32>
      %c0_18 = arith.constant 0 : index
      %c0_19 = arith.constant 0 : index
      %19 = vector.load %arg7[%c0_18, %c0_19] : memref<8x128xf32, #tpu.memory_space<vmem>>, vector<8x128xf32>
      tpu.vector_store %arg7[%c0_18, %c0_19], %18 {strides = array<i32>} : memref<8x128xf32, #tpu.memory_space<vmem>>, vector<8x128xf32>,
      %cst_20 = arith.constant 0.000000e+00 : f32
      %20 = vector.broadcast %cst_20 : f32 to vector<1x128xf32>
      %c0_21 = arith.constant 0 : index
      %c0_22 = arith.constant 0 : index
      %21 = vector.load %arg9[%c0_21, %c0_22] : memref<1x128xf32, #tpu.memory_space<vmem>>, vector<1x128xf32>
      tpu.vector_store %arg9[%c0_21, %c0_22], %20 {strides = array<i32>} : memref<1x128xf32, #tpu.memory_space<vmem>>, vector<1x128xf32>,
    } else {
    }
    %c0 = arith.constant 0 : index
    %c0_1 = arith.constant 0 : index
    %3 = vector.load %arg7[%c0, %c0_1] : memref<8x128xf32, #tpu.memory_space<vmem>>, vector<8x128xf32>
    %c0_2 = arith.constant 0 : index
    %c0_3 = arith.constant 0 : index
    %4 = vector.load %arg4[%c0_2, %c0_3] : memref<8x128xf32, #tpu.memory_space<vmem>>, vector<8x128xf32>
    %c0_4 = arith.constant 0 : index
    %c0_5 = arith.constant 0 : index
    %5 = vector.load %arg5[%c0_4, %c0_5] : memref<128x128xf32, #tpu.memory_space<vmem>>, vector<128x128xf32>
    %cst = arith.constant dense<0.000000e+00> : vector<8x128xf32>
    %6 = tpu.matmul %4, %5, %cst {dimension_numbers = #tpu.dot_dimension_numbers<[1], [0], [0], [1], [0, 0, 1, 1], [], []>} : vector<8x128xf32>, vector<128x128xf32>, vector<8x128xf32> -> vector<8x128xf32>
    %7 = arith.addf %3, %6 : vector<8x128xf32>
    %c0_6 = arith.constant 0 : index
    %c0_7 = arith.constant 0 : index
    %8 = vector.load %arg7[%c0_6, %c0_7] : memref<8x128xf32, #tpu.memory_space<vmem>>, vector<8x128xf32>
    tpu.vector_store %arg7[%c0_6, %c0_7], %7 {strides = array<i32>} : memref<8x128xf32, #tpu.memory_space<vmem>>, vector<8x128xf32>,
    %c0_8 = arith.constant 0 : index
    %c0_9 = arith.constant 0 : index
    %9 = vector.load %arg9[%c0_8, %c0_9] : memref<1x128xf32, #tpu.memory_space<vmem>>, vector<1x128xf32>
    %c0_10 = arith.constant 0 : index
    %c0_11 = arith.constant 0 : index
    %10 = vector.load %arg5[%c0_10, %c0_11] : memref<128x128xf32, #tpu.memory_space<vmem>>, vector<128x128xf32>
    %cst_12 = arith.constant dense<0.000000e+00> : vector<128xf32>
    %11 = vector.multi_reduction <add>, %10, %cst_12 [0] : vector<128x128xf32> to vector<128xf32>
    %12 = vector.shape_cast %11 : vector<128xf32> to vector<1x128xf32>
    %13 = arith.addf %9, %12 : vector<1x128xf32>
    %c0_13 = arith.constant 0 : index
    %c0_14 = arith.constant 0 : index
    %14 = vector.load %arg9[%c0_13, %c0_14] : memref<1x128xf32, #tpu.memory_space<vmem>>, vector<1x128xf32>
    tpu.vector_store %arg9[%c0_13, %c0_14], %13 {strides = array<i32>} : memref<1x128xf32, #tpu.memory_space<vmem>>, vector<1x128xf32>,
    %c0_i32_15 = arith.constant 0 : i32
    %15 = arith.cmpi eq, %arg2, %c0_i32_15 : i32
    %16 = arith.extui %15 : i1 to i32
    %c0_i32_16 = arith.constant 0 : i32
    %17 = arith.cmpi ne, %16, %c0_i32_16 : i32
    scf.if %17 {
      %c0_17 = arith.constant 0 : index
      %18 = memref.load %arg3[%c0_17] : memref<2xf32, #tpu.memory_space<smem>>
      %c1 = arith.constant 1 : index
      %19 = memref.load %arg3[%c1] : memref<2xf32, #tpu.memory_space<smem>>
      %c0_18 = arith.constant 0 : index
      %c0_19 = arith.constant 0 : index
      %20 = vector.load %arg7[%c0_18, %c0_19] : memref<8x128xf32, #tpu.memory_space<vmem>>, vector<8x128xf32>
      %c0_20 = arith.constant 0 : index
      %c0_21 = arith.constant 0 : index
      %21 = vector.load %arg6[%c0_20, %c0_21] : memref<1x128xf32, #tpu.memory_space<vmem>>, vector<1x128xf32>
      %c0_22 = arith.constant 0 : index
      %c0_23 = arith.constant 0 : index
      %22 = vector.load %arg9[%c0_22, %c0_23] : memref<1x128xf32, #tpu.memory_space<vmem>>, vector<1x128xf32>
      %23 = vector.broadcast %18 : f32 to vector<1x128xf32>
      %24 = arith.mulf %23, %22 : vector<1x128xf32>
      %25 = arith.subf %21, %24 : vector<1x128xf32>
      %26 = vector.broadcast %25 : vector<1x128xf32> to vector<8x128xf32>
      %27 = arith.addf %20, %26 : vector<8x128xf32>
      %28 = vector.broadcast %19 : f32 to vector<8x128xf32>
      %29 = arith.cmpf olt, %27, %28 : vector<8x128xf32>
      %30 = vector.broadcast %19 : f32 to vector<8x128xf32>
      %31 = arith.select %29, %27, %30 : vector<8x128xi1>, vector<8x128xf32>
      %c0_24 = arith.constant 0 : index
      %c0_25 = arith.constant 0 : index
      %32 = vector.load %arg7[%c0_24, %c0_25] : memref<8x128xf32, #tpu.memory_space<vmem>>, vector<8x128xf32>
      tpu.vector_store %arg7[%c0_24, %c0_25], %31 {strides = array<i32>} : memref<8x128xf32, #tpu.memory_space<vmem>>, vector<8x128xf32>,
      %33 = tpu.weird %31 : vector<8x128xf32> -> vector<8x128xi1>
      %cst_26 = arith.constant dense<true> : vector<8x128xi1>
      %34 = arith.xori %33, %cst_26 : vector<8x128xi1>
      %35 = vector.broadcast %19 : f32 to vector<8x128xf32>
      %36 = arith.cmpf olt, %31, %35 : vector<8x128xf32>
      %37 = arith.andi %34, %36 : vector<8x128xi1>
      %38 = tpu.iota {dimensions = array<i32: 0>} : vector<8x128xi32>
      %c8_i32 = arith.constant 8 : i32
      %39 = arith.muli %arg0, %c8_i32 : i32
      %40 = vector.broadcast %39 : i32 to vector<8x128xi32>
      %41 = arith.addi %38, %40 : vector<8x128xi32>
      %c6_i32 = arith.constant 6 : i32
      %42 = vector.broadcast %c6_i32 : i32 to vector<8x128xi32>
      %43 = arith.cmpi slt, %41, %42 : vector<8x128xi32>
      %44 = arith.andi %37, %43 : vector<8x128xi1>
      %cst_27 = arith.constant 0x7F800000 : f32
      %45 = vector.broadcast %cst_27 : f32 to vector<8x128xf32>
      %46 = arith.select %44, %31, %45 : vector<8x128xi1>, vector<8x128xf32>
      %47 = vector.shape_cast %46 : vector<8x128xf32> to vector<1x8x128xf32>
      %cst_28 = arith.constant dense<0x7F800000> : vector<1xf32>
      %48 = vector.multi_reduction <minimumf>, %47, %cst_28 [1, 2] : vector<1x8x128xf32> to vector<1xf32>
      %49 = vector.shape_cast %48 : vector<1xf32> to vector<1x1x1xf32>
      %50 = vector.extract %49[0, 0, 0] : f32 from vector<1x1x1xf32>
      %51 = vector.broadcast %50 : f32 to vector<8x128xf32>
      %c0_29 = arith.constant 0 : index
      %c0_30 = arith.constant 0 : index
      %52 = vector.load %arg8[%c0_29, %c0_30] : memref<8x128xf32, #tpu.memory_space<vmem>>, vector<8x128xf32>
      tpu.vector_store %arg8[%c0_29, %c0_30], %51 {strides = array<i32>} : memref<8x128xf32, #tpu.memory_space<vmem>>, vector<8x128xf32>,
    } else {
    }
    return
  }
  func.func @transform_0(%arg0: i32, %arg1: i32, %arg2: i32) -> i32 {
    %c0_i32 = arith.constant 0 : i32
    %c0_i32_0 = arith.constant 0 : i32
    return %c0_i32 : i32
  }
  func.func @transform_1(%arg0: i32, %arg1: i32, %arg2: i32) -> (i32, i32) {
    %c0_i32 = arith.constant 0 : i32
    return %arg0, %arg2 : i32, i32
  }
  func.func @transform_2(%arg0: i32, %arg1: i32, %arg2: i32) -> (i32, i32) {
    %c0_i32 = arith.constant 0 : i32
    return %arg2, %arg1 : i32, i32
  }
  func.func @transform_3(%arg0: i32, %arg1: i32, %arg2: i32) -> (i32, i32) {
    %c0_i32 = arith.constant 0 : i32
    %c0_i32_0 = arith.constant 0 : i32
    return %c0_i32, %arg1 : i32, i32
  }
  func.func @transform_4(%arg0: i32, %arg1: i32, %arg2: i32) -> (i32, i32) {
    %c0_i32 = arith.constant 0 : i32
    return %arg0, %arg1 : i32, i32
  }
  func.func @transform_5(%arg0: i32, %arg1: i32, %arg2: i32) -> (i32, i32) {
    %c0_i32 = arith.constant 0 : i32
    return %arg0, %arg1 : i32, i32
  }
}

</mosaic_0001>

<llo_original>
// kernel: spiking_dense_forward.1
$region0: #{spiking_dense_forward.1}
  #allocation0 [shape = 'u32[]', space=smem, size = 0x4, offset = 0x4, fixed_abs, tag = 'smem constant byte address 0x4 - core index']
  #allocation1 [shape = 'u32[72,128]{1,0:T(1,128)}', space=vmem, size = 0x9000, scoped, tag = 'internal scratch']
  #allocation2 [shape = 'f32[1,128]{1,0:T(1,128)}', space=vmem, size = 0x200, scoped, tag = 'scratch operand']
  %s0 = inlined_call_operand.vmem [shape: f32[2], index: 0, kind: input, shape index: {}]
  %s1 = inlined_call_operand.vmem [shape: f32[8,128], index: 1, kind: input, shape index: {}]
  %s2 = inlined_call_operand.vmem [shape: f32[128,128], index: 2, kind: input, shape index: {}]
  %s3 = inlined_call_operand.vmem [shape: f32[1,128], index: 3, kind: input, shape index: {}]
  %s4 = inlined_call_operand.hbm [shape: f32[8,128], index: 4, kind: output, shape index: {0}]
  %s5 = inlined_call_operand.vmem [shape: f32[8,128], index: 5, kind: output, shape index: {1}]
  %6 = xla_tuple %s4, %s5
  %s7 = sld [smem:[#allocation0]]
  $region46: #{spiking_dense_forward.1} parent=0
    _
  %s9 = ssub.s32 1, %s7
  %s10 = scalar_select 0, %s9, %s7
  $region1: #{spiking_dense_forward.1} parent=0
    #allocation3 [shape = 'u8[512]{0}', space=smem, size = 0x200, scoped, tag = 'input window, operand 0, single buffered']
    #allocation4 [shape = 's32[1]{0}', space=sflag, size = 0x4, scoped, tag = 'scoped memory for spiking_dense_forward.1']
    #allocation5 [shape = 's32[1]{0}', space=sflag, size = 0x4, scoped, tag = 'scoped memory for spiking_dense_forward.1']
    #allocation6 [shape = 'u8[4096]{0}', space=vmem, size = 0x1000, scoped, tag = 'output window, operand 0, single buffered']
    %11 = vsyncpa [#allocation5], 0
    %12 = vsyncpa [#allocation4], 0
    // Predicated region
    $region2: #{spiking_dense_forward.1} parent=1 // pred_check
      _
    $region3: #{spiking_dense_forward.1} parent=1 // pred_check_branch
      %14 = sbr.rel (0) target = $region5
    $region4: #{spiking_dense_forward.1} parent=1 // pred_region
      %16 = vsyncadd [#allocation5], 0
      %s18 = sshll.u32 %s0, 4
      %s19 = int_to_ptr.vmem [resolvable:$true] %s18
      %21 = dma.vmem_to_smem %s19, 16, [#allocation3], [#allocation5]
    $region5: #{spiking_dense_forward.1} parent=1 // pred_fallthru
      _
    // Predicated region
    $region6: #{spiking_dense_forward.1} parent=1 // pred_check
      _
    $region7: #{spiking_dense_forward.1} parent=1 // pred_check_branch
      %23 = sbr.rel (0) target = $region9
    $region8: #{spiking_dense_forward.1} parent=1 // pred_region
      _
    $region9: #{spiking_dense_forward.1} parent=1 // pred_fallthru
      _
    // Predicated region
    $region10: #{spiking_dense_forward.1} parent=1 // pred_check
      _
    $region11: #{spiking_dense_forward.1} parent=1 // pred_check_branch
      %25 = sbr.rel (0) target = $region13
    $region12: #{spiking_dense_forward.1} parent=1 // pred_region
      _
    $region13: #{spiking_dense_forward.1} parent=1 // pred_fallthru
      _
    // Predicated region
    $region14: #{spiking_dense_forward.1} parent=1 // pred_check
      _
    $region15: #{spiking_dense_forward.1} parent=1 // pred_check_branch
      %27 = sbr.rel (0) target = $region17
    $region16: #{spiking_dense_forward.1} parent=1 // pred_region
      _
    $region17: #{spiking_dense_forward.1} parent=1 // pred_fallthru
      _
    // Predicated region
    $region18: #{spiking_dense_forward.1} parent=1 // pred_check
      _
    $region19: #{spiking_dense_forward.1} parent=1 // pred_check_branch
      %29 = sbr.rel (0) target = $region21
    $region20: #{spiking_dense_forward.1} parent=1 // pred_region
      %31 = dma.done [#allocation5], 16
    $region21: #{spiking_dense_forward.1} parent=1 // pred_fallthru
      _
    %32 = sfence
    %p33 = scmp.eq.s32.totalorder 0, 0
    // Predicated region
    $region22: #{spiking_dense_forward.1} parent=1 // pred_check
      %p34 = pneg %p33
    $region23: #{spiking_dense_forward.1} parent=1 // pred_check_branch
      %36 = sbr.rel (%p34) target = $region25
    $region24: #{spiking_dense_forward.1} parent=1 // pred_region
      %37 = vst [vmem:[#allocation6] sm:$0xff] 0.0
      %38 = vst [vmem:[#allocation2] sm:$0x1] 0.0
    $region25: #{spiking_dense_forward.1} parent=1 // pred_fallthru
      _
    %v39 = vld [vmem:[#allocation6] sm:$0xff]
    %v40 = vld [vmem:[%s1] sm:$0xff]
    %v41 = vld [vmem:[%s2] sm:$0xff]
    %v42 = vld [vmem:[%s2 + $0x8] sm:$0xff]
    %v43 = vld [vmem:[%s2 + $0x10] sm:$0xff]
    %v44 = vld [vmem:[%s2 + $0x18] sm:$0xff]
    %v45 = vld [vmem:[%s2 + $0x20] sm:$0xff]
    %v46 = vld [vmem:[%s2 + $0x28] sm:$0xff]
    %v47 = vld [vmem:[%s2 + $0x30] sm:$0xff]
    %v48 = vld [vmem:[%s2 + $0x38] sm:$0xff]
    %v49 = vld [vmem:[%s2 + $0x40] sm:$0xff]
    %v50 = vld [vmem:[%s2 + $0x48] sm:$0xff]
    %v51 = vld [vmem:[%s2 + $0x50] sm:$0xff]
    %v52 = vld [vmem:[%s2 + $0x58] sm:$0xff]
    %v53 = vld [vmem:[%s2 + $0x60] sm:$0xff]
    %v54 = vld [vmem:[%s2 + $0x68] sm:$0xff]
    %v55 = vld [vmem:[%s2 + $0x70] sm:$0xff]
    %v56 = vld [vmem:[%s2 + $0x78] sm:$0xff]
    %57 = vmatpush.msra.mxu0 %v56
    %58 = vmatpush.msra.mxu0 %v55
    %59 = vmatpush.msra.mxu0 %v54
    %60 = vmatpush.msra.mxu0 %v53
    %61 = vmatpush.msra.mxu0 %v52
    %62 = vmatpush.msra.mxu0 %v51
    %63 = vmatpush.msra.mxu0 %v50
    %64 = vmatpush.msra.mxu0 %v49
    %65 = vmatpush.msra.mxu0 %v48
    %66 = vmatpush.msra.mxu0 %v47
    %67 = vmatpush.msra.mxu0 %v46
    %68 = vmatpush.msra.mxu0 %v45
    %69 = vmatpush.msra.mxu0 %v44
    %70 = vmatpush.msra.mxu0 %v43
    %71 = vmatpush.msra.mxu0 %v42
    %72 = vmatpush.msra.mxu0 %v41
    %73 = vmatmul.f32.gmra.mxu0 %v40
    %v74 = vpop.f32.mrf.mxu0
    %v75 = vadd.f32 0.0, %v74
    %76 = vdwg.mxu0
    %v77 = vadd.f32 %v39, %v75
    %78 = vst [vmem:[#allocation6] sm:$0xff] %v77
    %v79 = vld [vmem:[#allocation2] sm:$0x1]
    %v80 = vld [vmem:[%s2] sm:$0xff]
    %v81 = vld [vmem:[%s2 + $0x8] sm:$0xff]
    %v82 = vld [vmem:[%s2 + $0x10] sm:$0xff]
    %v83 = vld [vmem:[%s2 + $0x18] sm:$0xff]
    %v84 = vld [vmem:[%s2 + $0x20] sm:$0xff]
    %v85 = vld [vmem:[%s2 + $0x28] sm:$0xff]
    %v86 = vld [vmem:[%s2 + $0x30] sm:$0xff]
    %v87 = vld [vmem:[%s2 + $0x38] sm:$0xff]
    %v88 = vld [vmem:[%s2 + $0x40] sm:$0xff]
    %v89 = vld [vmem:[%s2 + $0x48] sm:$0xff]
    %v90 = vld [vmem:[%s2 + $0x50] sm:$0xff]
    %v91 = vld [vmem:[%s2 + $0x58] sm:$0xff]
    %v92 = vld [vmem:[%s2 + $0x60] sm:$0xff]
    %v93 = vld [vmem:[%s2 + $0x68] sm:$0xff]
    %v94 = vld [vmem:[%s2 + $0x70] sm:$0xff]
    %v95 = vld [vmem:[%s2 + $0x78] sm:$0xff]
    %v96 = vadd.f32 %v80, %v81
    %v97 = vadd.f32 %v96, %v82
    %v98 = vadd.f32 %v97, %v83
    %v99 = vadd.f32 %v98, %v84
    %v100 = vadd.f32 %v99, %v85
    %v101 = vadd.f32 %v100, %v86
    %v102 = vadd.f32 %v101, %v87
    %v103 = vadd.f32 %v102, %v88
    %v104 = vadd.f32 %v103, %v89
    %v105 = vadd.f32 %v104, %v90
    %v106 = vadd.f32 %v105, %v91
    %v107 = vadd.f32 %v106, %v92
    %v108 = vadd.f32 %v107, %v93
    %v109 = vadd.f32 %v108, %v94
    %v110 = vadd.f32 %v109, %v95
    %v111 = vrot.slane %v110, 4
    %v112 = vadd.f32 %v110, %v111
    %v113 = vrot.slane %v112, 2
    %v114 = vadd.f32 %v112, %v113
    %v115 = vrot.slane %v114, 1
    %v116 = vadd.f32 %v114, %v115
    %v117 = vadd.f32 %v79, %v116
    %118 = vst [vmem:[#allocation2] sm:$0x1] %v117
    // Predicated region
    $region26: #{spiking_dense_forward.1} parent=1 // pred_check
      %p119 = pneg %p33
    $region27: #{spiking_dense_forward.1} parent=1 // pred_check_branch
      %121 = sbr.rel (%p119) target = $region29
    $region28: #{spiking_dense_forward.1} parent=1 // pred_region
      %s122 = sld [smem:[#allocation3]]
      %s123 = sld [smem:[#allocation3 + $0x1]]
      %v124 = vld [vmem:[#allocation6] sm:$0xff]
      %v125 = vld [vmem:[%s3] sm:$0x1]
      %v126 = vld [vmem:[#allocation2] sm:$0x1]
      %v127 = vstv %s122
      %v128 = vmul.f32 %v127, %v126
      %v129 = vsub.f32 %v125, %v128
      %v131 = vperm.slane %v129, 0
      %v133 = vadd.f32 %v124, %v131
      %v134 = vstv %s123
      %vm135 = vcmp.lt.f32.partialorder %v133, %v134
      %v136 = vsel %vm135, %v133, %v134
      %137 = vst [vmem:[#allocation6] sm:$0xff] %v136
      %vm138 = vweird.f32 %v136
      %vm139 = vmxor %vm138, 1
      %vm140 = vcmp.lt.f32.partialorder %v136, %v134
      %vm141 = vmand %vm139, %vm140
      %v142 = vlaneseq
      %v143 = vshrl.u32 %v142, 7
      %s144 = smul.u32 0, 8
      %v145 = vstv %s144
      %v146 = vadd.s32 %v143, %v145
      %vm147 = vcmp.lt.s32.totalorder %v146, 6
      %vm148 = vmand %vm141, %vm147
      %v149 = vsel %vm148, %v136, inf
      %150 = vmin.xlane.f32.xlu0 %v149
      %v151 = vpop.xlane.xlu0 %150
      %v152 = vrot.slane %v151, 4
      %v153 = vmin.f32 %v151, %v152
      %v154 = vrot.slane %v153, 2
      %v155 = vmin.f32 %v153, %v154
      %v156 = vrot.slane %v155, 1
      %v157 = vmin.f32 %v155, %v156
      %s158 = vtos %v157
      %v159 = vstv %s158
      %160 = vst [vmem:[%s5] sm:$0xff] %v159
    $region29: #{spiking_dense_forward.1} parent=1 // pred_fallthru
      _
    // Predicated region
    $region30: #{spiking_dense_forward.1} parent=1 // pred_check
      _
    $region31: #{spiking_dense_forward.1} parent=1 // pred_check_branch
      %162 = sbr.rel (0) target = $region33
    $region32: #{spiking_dense_forward.1} parent=1 // pred_region
      %164 = vsyncadd [#allocation4], 0
      %s166 = sshll.u32 [#allocation6], 4
      %s167 = int_to_ptr.vmem [resolvable:$true] %s166
      %s168 = sshll.u32 %s4, 4
      %s169 = int_to_ptr.hbm [resolvable:$true] %s168
      %171 = dma.vmem_to_hbm [thread:$0]  %s167, 128, %s169, [#allocation4]
    $region33: #{spiking_dense_forward.1} parent=1 // pred_fallthru
      _
    // Predicated region
    $region34: #{spiking_dense_forward.1} parent=1 // pred_check
      _
    $region35: #{spiking_dense_forward.1} parent=1 // pred_check_branch
      %173 = sbr.rel (0) target = $region37
    $region36: #{spiking_dense_forward.1} parent=1 // pred_region
      _
    $region37: #{spiking_dense_forward.1} parent=1 // pred_fallthru
      _
    // Predicated region
    $region38: #{spiking_dense_forward.1} parent=1 // pred_check
      _
    $region39: #{spiking_dense_forward.1} parent=1 // pred_check_branch
      %175 = sbr.rel (0) target = $region41
    $region40: #{spiking_dense_forward.1} parent=1 // pred_region
      %177 = dma.done [#allocation4], 128
    $region41: #{spiking_dense_forward.1} parent=1 // pred_fallthru
      _
    // Predicated region
    $region42: #{spiking_dense_forward.1} parent=1 // pred_check
      _
    $region43: #{spiking_dense_forward.1} parent=1 // pred_check_branch
      %179 = sbr.rel (0) target = $region45
    $region44: #{spiking_dense_forward.1} parent=1 // pred_region
      _
    $region45: #{spiking_dense_forward.1} parent=1 // pred_fallthru
      _
    %180 = vsyncpa [#allocation4], 1
    %181 = vsyncpa [#allocation5], 1

</llo_original>
